<compile_context>
chip_gen: v7x
topology: tpu7x:2x2x1
jax: 0.10.0
libtpu: 0.0.40
codegen_flags: <defaults>
</compile_context>

<pallas_src>
from math import log2, floor

import jax
import jax.numpy as jnp
from jax.experimental import pallas as pl
from jax.experimental.pallas import tpu as pltpu


def _get_slopes(heads: int):
    """Same slope schedule as the PyTorch module."""
    def get_slopes_power_of_2(n):
        start = 2 ** (-2 ** (-(log2(n) - 3)))
        ratio = start
        return [start * ratio ** i for i in range(n)]

    if log2(heads).is_integer():
        return get_slopes_power_of_2(heads)
    closest_power_of_2 = 2 ** floor(log2(heads))
    return (
        get_slopes_power_of_2(closest_power_of_2)
        + get_slopes_power_of_2(2 * closest_power_of_2)[0::2][: heads - closest_power_of_2]
    )


def _alibi_kernel(neg_slopes_ref, row_ref, col_ref, out_ref, base_ref):
    # neg_slopes_ref: SMEM f32[heads]                 (precomputed -slope)
    # row_ref:        VMEM i32[tm, 1]  residx column block (indexed by i)
    # col_ref:        VMEM i32[1, tn]  residx row    block (indexed by j)
    # out_ref:        VMEM    [hb, tm, tn]  output block for (h, i, j)
    # base_ref:       VMEM f32[tm, tn]  scratch: clipped |delta|, reused for hb heads
    h = pl.program_id(0)
    hb = out_ref.shape[0]

    rel = col_ref[...] - row_ref[...]                    # i32: residx[j] - residx[i]
    base_ref[...] = jnp.minimum(jnp.abs(rel), 40).astype(jnp.float32)

    for k in range(hb):                                  # static unroll over heads-in-block
        out_ref[k] = (base_ref[...] * neg_slopes_ref[h * hb + k]).astype(out_ref.dtype)


_LANE = 128
_SUBLANE = 8
_MAX_TN = 2048            # lane-axis tile cap (large multiple of 128 -> unmasked vst)
_MAX_TM = 512             # sublane-axis tile cap
_OUT_BLOCK_BUDGET = 8 * 1024 * 1024   # ~8 MiB per-step output block (v7x-safe)


def _choose_tiles(n: int):
    """Bounded, layout-legal tiles for any N (no full (N, N) fallback)."""
    if n >= _LANE:
        tn = min(_MAX_TN, (n // _LANE) * _LANE)   # multiple of 128
    else:
        tn = n                                    # full dim (layout-legal)
    if n >= _SUBLANE:
        tm = min(_MAX_TM, (n // _SUBLANE) * _SUBLANE)   # multiple of 8
    else:
        tm = n
    return tm, tn


def _choose_head_block(heads: int, tm: int, tn: int, itemsize: int, multi_ij: bool):
    """Largest divisor of `heads` fitting the block budget (keep >=2 grid blocks)."""
    best = 1
    for hb in range(1, heads + 1):
        if heads % hb:
            continue
        if hb * tm * tn * itemsize > _OUT_BLOCK_BUDGET:
            break
        if (not multi_ij) and heads > 1 and hb > heads // 2:
            continue   # keep >=2 head blocks so v7x megacore has work to split
        best = hb
    return best


def alibi_positional_bias(residx: jax.Array, heads: int,
                          out_dtype=jnp.float32) -> jax.Array:
    """residx: 1-D int array of length N. Returns out_dtype[1, heads, N, N]."""
    n = residx.shape[0]
    residx_i = jnp.asarray(residx).astype(jnp.int32)      # exact integer rel. positions
    row = residx_i.reshape(n, 1)
    col = residx_i.reshape(1, n)
    neg_slopes = -jnp.asarray(_get_slopes(heads), dtype=jnp.float32)   # (heads,)

    itemsize = jnp.dtype(out_dtype).itemsize
    tm, tn = _choose_tiles(n)
    gi = pl.cdiv(n, tm)
    gj = pl.cdiv(n, tn)
    hb = _choose_head_block(heads, tm, tn, itemsize, gi * gj >= 2)
    gh = heads // hb

    out_block_bytes = hb * tm * tn * itemsize
    scratch_bytes = tm * tn * 4
    vmem_limit = int(min(48 * 1024 * 1024,
                         max(32 * 1024 * 1024,
                             2 * out_block_bytes + scratch_bytes + (4 << 20))))

    cost = pl.CostEstimate(
        flops=2 * heads * n * n,
        transcendentals=0,
        bytes_accessed=itemsize * heads * n * n + 8 * n,
    )

    out = pl.pallas_call(
        _alibi_kernel,
        out_shape=jax.ShapeDtypeStruct((1, heads, n, n), out_dtype),
        grid=(gh, gi, gj),
        in_specs=[
            pl.BlockSpec(memory_space=pltpu.SMEM),               # -slopes, whole array
            pl.BlockSpec((tm, 1), lambda h, i, j: (i, 0)),       # residx column tile
            pl.BlockSpec((1, tn), lambda h, i, j: (0, j)),       # residx row tile
        ],
        out_specs=pl.BlockSpec((None, hb, tm, tn), lambda h, i, j: (0, h, i, j)),
        scratch_shapes=[pltpu.VMEM((tm, tn), jnp.float32)],
        compiler_params=pltpu.CompilerParams(
            dimension_semantics=("parallel", "parallel", "parallel"),
            vmem_limit_bytes=vmem_limit,
        ),
        cost_estimate=cost,
    )(neg_slopes, row, col)
    return out


def _reference(residx: jax.Array, heads: int) -> jax.Array:
    """Pure-JAX reference mirroring the PyTorch forward."""
    n = residx.shape[0]
    residx_i = residx.astype(jnp.int32)
    rel = residx_i[None, :] - residx_i[:, None]                # (N, N)
    bias = jnp.minimum(jnp.abs(rel), 40).astype(jnp.float32)   # clip(max=40)
    bias = jnp.broadcast_to(bias[None, None], (1, heads, n, n))
    slopes = jnp.asarray(_get_slopes(heads), dtype=jnp.float32).reshape(1, heads, 1, 1)
    return bias * -slopes


if __name__ == "__main__":
    key = jax.random.PRNGKey(0)

    # (seq, heads) cases:
    #  (16, 8)  : tiny full-extent tiles, heads-blocked (hb=4), 2 parallel head blocks
    #  (64, 6)  : non-power-of-2 heads slope schedule, hb=3
    #  (100, 8) : irregular N (not a multiple of 8 -> masked boundary block on i axis)
    #  (512, 8) : single (i, j) tile, hb=4 -> 2 x 4 MiB blocks
    for t, (seq, heads) in enumerate(((16, 8), (64, 6), (100, 8), (512, 8))):
        residx = jnp.cumsum(
            jax.random.randint(jax.random.fold_in(key, t), (seq,), 1, 5)
        ).astype(jnp.int32)
        out = jax.block_until_ready(alibi_positional_bias(residx, heads))
        ref = _reference(residx, heads)
        assert out.shape == (1, heads, seq, seq), (seq, heads, out.shape)
        assert out.dtype == jnp.float32
        err = float(jnp.max(jnp.abs(out - ref)))
        assert jnp.allclose(out, ref, atol=1e-6, rtol=1e-6), (seq, heads, err)

    print("KERNEL_OK")
</pallas_src>

<mosaic_0001>
module attributes {stable_mosaic.version = 11 : i64} {
  func.func @_alibi_kernel(%arg0: i32, %arg1: i32, %arg2: i32, %arg3: memref<8xf32, #tpu.memory_space<smem>>, %arg4: memref<16x1xi32, #tpu.memory_space<vmem>>, %arg5: memref<1x16xi32, #tpu.memory_space<vmem>>, %arg6: memref<1x4x16x16xf32, #tpu.memory_space<vmem>>, %arg7: memref<16x16xf32, #tpu.memory_space<vmem>>) attributes {dimension_semantics = [#tpu.dimension_semantics<parallel>, #tpu.dimension_semantics<parallel>, #tpu.dimension_semantics<parallel>], iteration_bounds = array<i64: 2, 1, 1>, scalar_prefetch = 0 : i64, scratch_operands = 1 : i64, tpu.core_type = #tpu.core_type<tc>, window_params = [{transform_indices = @transform_0, window_bounds = array<i64: 8>}, {transform_indices = @transform_1, window_bounds = array<i64: 16, 1>}, {transform_indices = @transform_2, window_bounds = array<i64: 1, 16>}, {transform_indices = @transform_3, window_bounds = array<i64: 1, 4, 16, 16>}]} {
    %c0 = arith.constant 0 : index
    %c0_0 = arith.constant 0 : index
    %0 = vector.load %arg5[%c0, %c0_0] : memref<1x16xi32, #tpu.memory_space<vmem>>, vector<1x16xi32>
    %c0_1 = arith.constant 0 : index
    %c0_2 = arith.constant 0 : index
    %1 = vector.load %arg4[%c0_1, %c0_2] : memref<16x1xi32, #tpu.memory_space<vmem>>, vector<16x1xi32>
    %2 = vector.broadcast %0 : vector<1x16xi32> to vector<16x16xi32>
    %3 = vector.broadcast %1 : vector<16x1xi32> to vector<16x16xi32>
    %4 = arith.subi %2, %3 : vector<16x16xi32>
    %5 = math.absi %4 : vector<16x16xi32>
    %c40_i32 = arith.constant 40 : i32
    %6 = vector.broadcast %c40_i32 : i32 to vector<16x16xi32>
    %7 = arith.minsi %5, %6 : vector<16x16xi32>
    %8 = arith.sitofp %7 : vector<16x16xi32> to vector<16x16xf32>
    %c0_3 = arith.constant 0 : index
    %c0_4 = arith.constant 0 : index
    %9 = vector.load %arg7[%c0_3, %c0_4] : memref<16x16xf32, #tpu.memory_space<vmem>>, vector<16x16xf32>
    tpu.vector_store %arg7[%c0_3, %c0_4], %8 {strides = array<i32>} : memref<16x16xf32, #tpu.memory_space<vmem>>, vector<16x16xf32>,
    %c0_5 = arith.constant 0 : index
    %c0_6 = arith.constant 0 : index
    %10 = vector.load %arg7[%c0_5, %c0_6] : memref<16x16xf32, #tpu.memory_space<vmem>>, vector<16x16xf32>
    %c4_i32 = arith.constant 4 : i32
    %11 = arith.muli %arg0, %c4_i32 : i32
    %c0_i32 = arith.constant 0 : i32
    %12 = arith.addi %11, %c0_i32 : i32
    %13 = arith.index_cast %12 : i32 to index
    %14 = memref.load %arg3[%13] : memref<8xf32, #tpu.memory_space<smem>>
    %15 = vector.broadcast %14 : f32 to vector<16x16xf32>
    %16 = arith.mulf %10, %15 : vector<16x16xf32>
    %c0_7 = arith.constant 0 : index
    %c0_8 = arith.constant 0 : index
    %c0_9 = arith.constant 0 : index
    %c0_10 = arith.constant 0 : index
    %17 = vector.load %arg6[%c0_7, %c0_8, %c0_9, %c0_10] : memref<1x4x16x16xf32, #tpu.memory_space<vmem>>, vector<1x1x16x16xf32>
    %18 = vector.shape_cast %17 : vector<1x1x16x16xf32> to vector<16x16xf32>
    %19 = vector.shape_cast %16 : vector<16x16xf32> to vector<1x1x16x16xf32>
    tpu.vector_store %arg6[%c0_7, %c0_8, %c0_9, %c0_10], %19 {strides = array<i32>} : memref<1x4x16x16xf32, #tpu.memory_space<vmem>>, vector<1x1x16x16xf32>,
    %c0_11 = arith.constant 0 : index
    %c0_12 = arith.constant 0 : index
    %20 = vector.load %arg7[%c0_11, %c0_12] : memref<16x16xf32, #tpu.memory_space<vmem>>, vector<16x16xf32>
    %c4_i32_13 = arith.constant 4 : i32
    %21 = arith.muli %arg0, %c4_i32_13 : i32
    %c1_i32 = arith.constant 1 : i32
    %22 = arith.addi %21, %c1_i32 : i32
    %23 = arith.index_cast %22 : i32 to index
    %24 = memref.load %arg3[%23] : memref<8xf32, #tpu.memory_space<smem>>
    %25 = vector.broadcast %24 : f32 to vector<16x16xf32>
    %26 = arith.mulf %20, %25 : vector<16x16xf32>
    %c0_14 = arith.constant 0 : index
    %c1 = arith.constant 1 : index
    %c0_15 = arith.constant 0 : index
    %c0_16 = arith.constant 0 : index
    %27 = vector.load %arg6[%c0_14, %c1, %c0_15, %c0_16] : memref<1x4x16x16xf32, #tpu.memory_space<vmem>>, vector<1x1x16x16xf32>
    %28 = vector.shape_cast %27 : vector<1x1x16x16xf32> to vector<16x16xf32>
    %29 = vector.shape_cast %26 : vector<16x16xf32> to vector<1x1x16x16xf32>
    tpu.vector_store %arg6[%c0_14, %c1, %c0_15, %c0_16], %29 {strides = array<i32>} : memref<1x4x16x16xf32, #tpu.memory_space<vmem>>, vector<1x1x16x16xf32>,
    %c0_17 = arith.constant 0 : index
    %c0_18 = arith.constant 0 : index
    %30 = vector.load %arg7[%c0_17, %c0_18] : memref<16x16xf32, #tpu.memory_space<vmem>>, vector<16x16xf32>
    %c4_i32_19 = arith.constant 4 : i32
    %31 = arith.muli %arg0, %c4_i32_19 : i32
    %c2_i32 = arith.constant 2 : i32
    %32 = arith.addi %31, %c2_i32 : i32
    %33 = arith.index_cast %32 : i32 to index
    %34 = memref.load %arg3[%33] : memref<8xf32, #tpu.memory_space<smem>>
    %35 = vector.broadcast %34 : f32 to vector<16x16xf32>
    %36 = arith.mulf %30, %35 : vector<16x16xf32>
    %c0_20 = arith.constant 0 : index
    %c2 = arith.constant 2 : index
    %c0_21 = arith.constant 0 : index
    %c0_22 = arith.constant 0 : index
    %37 = vector.load %arg6[%c0_20, %c2, %c0_21, %c0_22] : memref<1x4x16x16xf32, #tpu.memory_space<vmem>>, vector<1x1x16x16xf32>
    %38 = vector.shape_cast %37 : vector<1x1x16x16xf32> to vector<16x16xf32>
    %39 = vector.shape_cast %36 : vector<16x16xf32> to vector<1x1x16x16xf32>
    tpu.vector_store %arg6[%c0_20, %c2, %c0_21, %c0_22], %39 {strides = array<i32>} : memref<1x4x16x16xf32, #tpu.memory_space<vmem>>, vector<1x1x16x16xf32>,
    %c0_23 = arith.constant 0 : index
    %c0_24 = arith.constant 0 : index
    %40 = vector.load %arg7[%c0_23, %c0_24] : memref<16x16xf32, #tpu.memory_space<vmem>>, vector<16x16xf32>
    %c4_i32_25 = arith.constant 4 : i32
    %41 = arith.muli %arg0, %c4_i32_25 : i32
    %c3_i32 = arith.constant 3 : i32
    %42 = arith.addi %41, %c3_i32 : i32
    %43 = arith.index_cast %42 : i32 to index
    %44 = memref.load %arg3[%43] : memref<8xf32, #tpu.memory_space<smem>>
    %45 = vector.broadcast %44 : f32 to vector<16x16xf32>
    %46 = arith.mulf %40, %45 : vector<16x16xf32>
    %c0_26 = arith.constant 0 : index
    %c3 = arith.constant 3 : index
    %c0_27 = arith.constant 0 : index
    %c0_28 = arith.constant 0 : index
    %47 = vector.load %arg6[%c0_26, %c3, %c0_27, %c0_28] : memref<1x4x16x16xf32, #tpu.memory_space<vmem>>, vector<1x1x16x16xf32>
    %48 = vector.shape_cast %47 : vector<1x1x16x16xf32> to vector<16x16xf32>
    %49 = vector.shape_cast %46 : vector<16x16xf32> to vector<1x1x16x16xf32>
    tpu.vector_store %arg6[%c0_26, %c3, %c0_27, %c0_28], %49 {strides = array<i32>} : memref<1x4x16x16xf32, #tpu.memory_space<vmem>>, vector<1x1x16x16xf32>,
    return
  }
  func.func @transform_0(%arg0: i32, %arg1: i32, %arg2: i32) -> i32 {
    %c0_i32 = arith.constant 0 : i32
    %c0_i32_0 = arith.constant 0 : i32
    return %c0_i32 : i32
  }
  func.func @transform_1(%arg0: i32, %arg1: i32, %arg2: i32) -> (i32, i32) {
    %c0_i32 = arith.constant 0 : i32
    %c0_i32_0 = arith.constant 0 : i32
    return %arg1, %c0_i32 : i32, i32
  }
  func.func @transform_2(%arg0: i32, %arg1: i32, %arg2: i32) -> (i32, i32) {
    %c0_i32 = arith.constant 0 : i32
    %c0_i32_0 = arith.constant 0 : i32
    return %c0_i32, %arg2 : i32, i32
  }
  func.func @transform_3(%arg0: i32, %arg1: i32, %arg2: i32) -> (i32, i32, i32, i32) {
    %c0_i32 = arith.constant 0 : i32
    %c0_i32_0 = arith.constant 0 : i32
    return %c0_i32, %arg0, %arg1, %arg2 : i32, i32, i32, i32
  }
}

</mosaic_0001>

<llo_original>
// kernel: tpu_custom_call.1
$region0: #{tpu_custom_call.1}
  #allocation0 [shape = 'u32[]', space=smem, size = 0x4, offset = 0x4, fixed_abs, tag = 'smem constant byte address 0x4 - core index']
  #allocation1 [shape = 'u32[144,128]{1,0:T(1,128)}', space=vmem, size = 0x12000, scoped, tag = 'internal scratch']
  #allocation2 [shape = 'f32[16,16]{1,0:T(8,128)}', space=vmem, size = 0x2000, scoped, tag = 'scratch operand']
  %s0 = inlined_call_operand.vmem [shape: f32[8], index: 0, kind: input, shape index: {}]
  %s1 = inlined_call_operand.vmem [shape: s32[16,1], index: 1, kind: input, shape index: {}]
  %s2 = inlined_call_operand.vmem [shape: s32[1,16], index: 2, kind: input, shape index: {}]
  %s3 = inlined_call_operand.hbm [shape: f32[1,8,16,16], index: 3, kind: output, shape index: {}]
  %s4 = sld [smem:[#allocation0]]
  $region49: #{tpu_custom_call.1} parent=0
    _
  %s6 = ssub.s32 1, %s4
  %s7 = scalar_select 0, %s6, %s4
  $region1: #{tpu_custom_call.1} parent=0
    #allocation3 [shape = 'u8[512]{0}', space=smem, size = 0x200, scoped, tag = 'input window, operand 0, single buffered']
    #allocation4 [shape = 's32[2]{0}', space=sflag, size = 0x8, scoped, tag = 'scoped memory for tpu_custom_call.1']
    #allocation5 [shape = 's32[2]{0}', space=sflag, size = 0x8, scoped, tag = 'scoped memory for tpu_custom_call.1']
    #allocation6 [shape = 'u8[65536]{0}', space=vmem, size = 0x10000, scoped, tag = 'output window, operand 0']
    %8 = vsyncpa [#allocation5], 0
    %9 = vsyncpa [#allocation4], 0
    %s10 = scalar_lea.sflag [#allocation4], 1
    %11 = vsyncpa %s10, 0
    loop: start=0, step=1, limit=4
    $region2: #{tpu_custom_call.1} parent=1 // loop_pre_header
      _
    $region3: #{tpu_custom_call.1} parent=1 // loop_header
      %s13 = sphi 0, %s17
      %p14 = scmp.ge.s32.totalorder %s13, 4
      %s20 = sphi 0, %s39
      %s21 = sphi 0, %s35
      %s22 = sphi 0, %s31
      %s23 = sphi 0, %s20
      %s24 = sphi 0, %s21
      %s25 = sphi 0, %s22
      %s26 = sphi 0, %s23
      %s27 = sphi 0, %s24
      %s28 = sphi 0, %s25
      %s40 = sphi 0, %s40
      %s42 = sphi 0, %s40
      %s43 = sphi 0, %s42
      %s57 = sphi 0, %s43
      %s63 = sphi 0, %s65
      %s66 = sphi 0, %s63
      %s67 = sphi 0, %s66
      %s83 = sphi 0, %s67
      %s89 = sphi 0, %s91
      %s92 = sphi 0, %s89
      %s93 = sphi 0, %s92
      %s109 = sphi 0, %s93
      %s119 = sphi 0, %s121
      %s122 = sphi 0, %s119
      %s123 = sphi 0, %s122
      %s139 = sphi 0, %s123
    $region4: #{tpu_custom_call.1} parent=1 // loop_header_branch
      %16 = sbr.rel (%p14) target = $region8
    $region5: #{tpu_custom_call.1} parent=1 // loop_body
      %s18 = ssub.s32 %s13, 1
      %s19 = ssub.s32 %s13, 2
      %s29 = sadd.s32 1, %s22
      %p30 = scmp.ge.s32.totalorder %s29, 1
      %s31 = scalar_select %p30, 0, %s29
      %s32 = sadd.s32 1, %s21
      %s33 = scalar_select %p30, %s32, %s21
      %p34 = scmp.ge.s32.totalorder %s33, 1
      %s35 = scalar_select %p34, 0, %s33
      %s36 = sadd.s32 1, %s20
      %s37 = scalar_select %p34, %s36, %s20
      %p38 = scmp.ge.s32.totalorder %s37, 2
      %s39 = scalar_select %p38, 0, %s37
      %s41 = sadd.s32 %s40, 1
      %p44 = scmp.eq.s32.totalorder %s13, 1
      %p45 = scmp.ne.s32.totalorder %s40, %s42
      %p46 = scmp.eq.s32.totalorder %s13, 0
      %p47 = por %p45, %p46
      %p48 = scmp.ne.s32.totalorder %s40, %s42
      %p49 = scmp.eq.s32.totalorder %s18, 1
      %p50 = por %p48, %p49
      %p51 = scmp.ne.s32.totalorder %s42, %s43
      %p52 = scmp.eq.s32.totalorder %s18, 0
      %p53 = por %p51, %p52
      %p54 = scmp.ne.s32.totalorder %s42, %s43
      %p55 = scmp.eq.s32.totalorder %s19, 1
      %p56 = por %p54, %p55
      %p58 = scmp.ne.s32.totalorder %s43, %s57
      %p59 = scmp.eq.s32.totalorder %s19, 0
      %p60 = por %p58, %p59
      %s61 = ssub.s32 %s21, %s35
      %p62 = scmp.eq.s32.totalorder %s61, 0
      %s64 = sadd.s32 %s63, 1
      %s65 = scalar_select %p62, %s63, %s64
      %p68 = pneg %p62
      %p69 = scmp.eq.s32.totalorder %s13, 1
      %p70 = por %p68, %p69
      %p71 = scmp.ne.s32.totalorder %s63, %s66
      %p72 = scmp.eq.s32.totalorder %s13, 0
      %p73 = por %p71, %p72
      %p74 = scmp.ne.s32.totalorder %s63, %s66
      %p75 = scmp.eq.s32.totalorder %s18, 1
      %p76 = por %p74, %p75
      %p77 = scmp.ne.s32.totalorder %s66, %s67
      %p78 = scmp.eq.s32.totalorder %s18, 0
      %p79 = por %p77, %p78
      %p80 = scmp.ne.s32.totalorder %s66, %s67
      %p81 = scmp.eq.s32.totalorder %s19, 1
      %p82 = por %p80, %p81
      %p84 = scmp.ne.s32.totalorder %s67, %s83
      %p85 = scmp.eq.s32.totalorder %s19, 0
      %p86 = por %p84, %p85
      %s87 = ssub.s32 %s22, %s31
      %p88 = scmp.eq.s32.totalorder %s87, 0
      %s90 = sadd.s32 %s89, 1
      %s91 = scalar_select %p88, %s89, %s90
      %p94 = pneg %p88
      %p95 = scmp.eq.s32.totalorder %s13, 1
      %p96 = por %p94, %p95
      %p97 = scmp.ne.s32.totalorder %s89, %s92
      %p98 = scmp.eq.s32.totalorder %s13, 0
      %p99 = por %p97, %p98
      %p100 = scmp.ne.s32.totalorder %s89, %s92
      %p101 = scmp.eq.s32.totalorder %s18, 1
      %p102 = por %p100, %p101
      %p103 = scmp.ne.s32.totalorder %s92, %s93
      %p104 = scmp.eq.s32.totalorder %s18, 0
      %p105 = por %p103, %p104
      %p106 = scmp.ne.s32.totalorder %s92, %s93
      %p107 = scmp.eq.s32.totalorder %s19, 1
      %p108 = por %p106, %p107
      %p110 = scmp.ne.s32.totalorder %s93, %s109
      %p111 = scmp.eq.s32.totalorder %s19, 0
      %p112 = por %p110, %p111
      %s113 = ssub.s32 %s20, %s39
      %s114 = ssub.s32 %s21, %s35
      %s115 = sor.u32 %s113, %s114
      %s116 = ssub.s32 %s22, %s31
      %s117 = sor.u32 %s115, %s116
      %p118 = scmp.eq.s32.totalorder %s117, 0
      %s120 = sadd.s32 %s119, 1
      %s121 = scalar_select %p118, %s119, %s120
      %p124 = pneg %p118
      %p125 = scmp.eq.s32.totalorder %s13, 1
      %p126 = por %p124, %p125
      %p127 = scmp.ne.s32.totalorder %s119, %s122
      %p128 = scmp.eq.s32.totalorder %s13, 0
      %p129 = por %p127, %p128
      %p130 = scmp.ne.s32.totalorder %s119, %s122
      %p131 = scmp.eq.s32.totalorder %s18, 1
      %p132 = por %p130, %p131
      %p133 = scmp.ne.s32.totalorder %s122, %s123
      %p134 = scmp.eq.s32.totalorder %s18, 0
      %p135 = por %p133, %p134
      %p136 = scmp.ne.s32.totalorder %s122, %s123
      %p137 = scmp.eq.s32.totalorder %s19, 1
      %p138 = por %p136, %p137
      %p140 = scmp.ne.s32.totalorder %s123, %s139
      %p141 = scmp.eq.s32.totalorder %s19, 0
      %p142 = por %p140, %p141
      %p143 = scmp.le.s32.totalorder 1, %s13
      %p144 = scmp.lt.s32.totalorder %s13, 3
      %p145 = pnand %p143, %p144
      %p146 = pneg %p145
      // Predicated region
      $region9: #{tpu_custom_call.1} parent=5 // pred_check
        _
      $region10: #{tpu_custom_call.1} parent=5 // pred_check_branch
        %148 = sbr.rel (%p145) target = $region12
      $region11: #{tpu_custom_call.1} parent=5 // pred_region
        %s149 = ssub.s32 %s13, 1
        // Predicated region
        $region13: #{tpu_custom_call.1} parent=11 // pred_check
          %p150 = pneg %p53
        $region14: #{tpu_custom_call.1} parent=11 // pred_check_branch
          %152 = sbr.rel (%p150) target = $region16
        $region15: #{tpu_custom_call.1} parent=11 // pred_region
          %s154 = ssub.s32 16, 16
          %155 = vsyncadd [#allocation5], %s154
          %s157 = sshll.u32 %s0, 4
          %s158 = int_to_ptr.vmem [resolvable:$true] %s157
          %160 = dma.vmem_to_smem %s158, 16, [#allocation3], [#allocation5]
        $region16: #{tpu_custom_call.1} parent=11 // pred_fallthru
          _
        // Predicated region
        $region17: #{tpu_custom_call.1} parent=11 // pred_check
          %p161 = pneg %p79
        $region18: #{tpu_custom_call.1} parent=11 // pred_check_branch
          %163 = sbr.rel (%p161) target = $region20
        $region19: #{tpu_custom_call.1} parent=11 // pred_region
          %s164 = smul.u32 2, %s24
          %p165 = scmp.lt.s32.totalorder %s164, 1
          %s166 = scalar_select %p165, %s164, 1
          %s167 = smul.addr %s166, 8
          %s168 = scalar_lea.vmem %s1, %s167
          %s169 = smul.u32 2, %s24
        $region20: #{tpu_custom_call.1} parent=11 // pred_fallthru
          _
        // Predicated region
        $region21: #{tpu_custom_call.1} parent=11 // pred_check
          %p170 = pneg %p105
        $region22: #{tpu_custom_call.1} parent=11 // pred_check_branch
          %172 = sbr.rel (%p170) target = $region24
        $region23: #{tpu_custom_call.1} parent=11 // pred_region
          %p173 = scmp.lt.s32.totalorder %s25, 0
          %s174 = scalar_select %p173, %s25, 0
          %s175 = scalar_lea.vmem %s2, %s174
        $region24: #{tpu_custom_call.1} parent=11 // pred_fallthru
          _
      $region12: #{tpu_custom_call.1} parent=5 // pred_fallthru
        _
      %p176 = scmp.lt.s32.totalorder %s13, 2
      // Predicated region
      $region25: #{tpu_custom_call.1} parent=5 // pred_check
        %p177 = pneg %p176
      $region26: #{tpu_custom_call.1} parent=5 // pred_check_branch
        %179 = sbr.rel (%p177) target = $region28
      $region27: #{tpu_custom_call.1} parent=5 // pred_region
        _
      $region28: #{tpu_custom_call.1} parent=5 // pred_fallthru
        _
      %p180 = scmp.le.s32.totalorder 1, %s13
      %p181 = scmp.lt.s32.totalorder %s13, 3
      %p182 = pnand %p180, %p181
      %p183 = pneg %p182
      // Predicated region
      $region29: #{tpu_custom_call.1} parent=5 // pred_check
        _
      $region30: #{tpu_custom_call.1} parent=5 // pred_check_branch
        %185 = sbr.rel (%p182) target = $region32
      $region31: #{tpu_custom_call.1} parent=5 // pred_region
        %s186 = ssub.s32 %s13, 1
        // Predicated region
        $region33: #{tpu_custom_call.1} parent=31 // pred_check
          %p187 = pneg %p53
        $region34: #{tpu_custom_call.1} parent=31 // pred_check_branch
          %189 = sbr.rel (%p187) target = $region36
        $region35: #{tpu_custom_call.1} parent=31 // pred_region
          %190 = dma.done [#allocation5], 16
        $region36: #{tpu_custom_call.1} parent=31 // pred_fallthru
          _
        %191 = sfence
        %p192 = pneg %p53
        %p193 = pneg %p50
        %s194 = smul.u32 2, %s24
        %p195 = scmp.lt.s32.totalorder %s194, 1
        %s196 = scalar_select %p195, %s194, 1
        %s197 = smul.addr %s196, 8
        %s198 = scalar_lea.vmem %s1, %s197
        %p199 = pneg %p79
        %p200 = pneg %p76
        %p201 = scmp.lt.s32.totalorder %s25, 0
        %s202 = scalar_select %p201, %s25, 0
        %s203 = scalar_lea.vmem %s2, %s202
        %p204 = pneg %p105
        %p205 = pneg %p102
        %p206 = pneg %p135
        %p207 = pneg %p132
        %s208 = sand.u32 %s122, 1
        %s209 = scalar_lea.sflag [#allocation4], %s208
        %s210 = sand.u32 %s122, 1
        %s211 = smul.addr %s210, 64
        %s212 = scalar_lea.vmem [#allocation6], %s211
        %s213 = smul.u32 2, %s24
        %p214 = scmp.lt.s32.totalorder %s213, 1
        %s215 = scalar_select %p214, %s213, 1
        %s216 = smul.addr %s215, 8
        %s217 = scalar_lea.vmem %s1, %s216
        %s218 = smul.u32 2, %s24
        %p219 = scmp.lt.s32.totalorder %s25, 0
        %s220 = scalar_select %p219, %s25, 0
        %s221 = scalar_lea.vmem %s2, %s220
        %s222 = smul.u32 4, %s23
        %s223 = smul.u32 2, %s24
        %v224 = vld [vmem:[%s221] sm:$0x1]
        %v225 = vld [vmem:[%s217] sm:$0xff]
        %v226 = vld [vmem:[%s217 + $0x8] sm:$0xff]
        %v227 = vlaneseq
        %v228 = vshrl.u32 %v227, 7
        %v229 = vsub.s32 0, %v228
        %v230 = vrot.slane %v224, %v229
        %231 = vset.pattern.permute.xlu0 0
        %232 = vperm.xlu0 %231, %v225
        %v233 = vpop.permute.xlu0 %232
        %234 = vset.pattern.permute.xlu0 0
        %235 = vperm.xlu0 %234, %v226
        %v236 = vpop.permute.xlu0 %235
        %v237 = vsub.s32 %v230, %v233
        %v238 = vsub.s32 %v230, %v236
        %vm239 = vcmp.lt.s32.totalorder %v237, 0
        %v240 = vsub.s32 0, %v237
        %v241 = vsel %vm239, %v240, %v237
        %vm242 = vcmp.lt.s32.totalorder %v238, 0
        %v243 = vsub.s32 0, %v238
        %v244 = vsel %vm242, %v243, %v238
        %vm245 = vcmp.lt.s32.totalorder %v241, 40
        %v246 = vsel %vm245, %v241, 40
        %vm247 = vcmp.lt.s32.totalorder %v244, 40
        %v248 = vsel %vm247, %v244, 40
        %v249 = vcvt.s32.f32 %v246
        %v250 = vcvt.s32.f32 %v248
        %vm251 = vcmask 130048
        %252 = vst.msk [vmem:[#allocation2] sm:$0xff] %vm251, %v249
        %253 = vst.msk [vmem:[#allocation2 + $0x8] sm:$0xff] %vm251, %v250
        %v254 = vld [vmem:[#allocation2] sm:$0xff]
        %v255 = vld [vmem:[#allocation2 + $0x8] sm:$0xff]
        %s256 = smul.u32 %s23, 4
        %s257 = sld [smem:[#allocation3 + %s256]]
        %v258 = vstv %s257
        %v259 = vmul.f32 %v254, %v258
        %v260 = vmul.f32 %v255, %v258
        %261 = vst.msk [vmem:[%s212] sm:$0xff] %vm251, %v259
        %262 = vst.msk [vmem:[%s212 + $0x8] sm:$0xff] %vm251, %v260
        %v263 = vld [vmem:[#allocation2] sm:$0xff]
        %v264 = vld [vmem:[#allocation2 + $0x8] sm:$0xff]
        %s265 = sadd.s32 %s256, 1
        %s266 = sld [smem:[#allocation3 + %s265]]
        %v267 = vstv %s266
        %v268 = vmul.f32 %v263, %v267
        %v269 = vmul.f32 %v264, %v267
        %s270 = scalar_lea.vmem %s212, 16 [#allocation6]
        %271 = vst.msk [vmem:[%s270] sm:$0xff] %vm251, %v268
        %272 = vst.msk [vmem:[%s270 + $0x8] sm:$0xff] %vm251, %v269
        %v273 = vld [vmem:[#allocation2] sm:$0xff]
        %v274 = vld [vmem:[#allocation2 + $0x8] sm:$0xff]
        %s275 = sadd.s32 %s256, 2
        %s276 = sld [smem:[#allocation3 + %s275]]
        %v277 = vstv %s276
        %v278 = vmul.f32 %v273, %v277
        %v279 = vmul.f32 %v274, %v277
        %s280 = scalar_lea.vmem %s212, 32 [#allocation6]
        %281 = vst.msk [vmem:[%s280] sm:$0xff] %vm251, %v278
        %282 = vst.msk [vmem:[%s280 + $0x8] sm:$0xff] %vm251, %v279
        %v283 = vld [vmem:[#allocation2] sm:$0xff]
        %v284 = vld [vmem:[#allocation2 + $0x8] sm:$0xff]
        %s285 = sadd.s32 %s256, 3
        %s286 = sld [smem:[#allocation3 + %s285]]
        %v287 = vstv %s286
        %v288 = vmul.f32 %v283, %v287
        %v289 = vmul.f32 %v284, %v287
        %s290 = scalar_lea.vmem %s212, 48 [#allocation6]
        %291 = vst.msk [vmem:[%s290] sm:$0xff] %vm251, %v288
        %292 = vst.msk [vmem:[%s290 + $0x8] sm:$0xff] %vm251, %v289
        %s293 = sand.u32 %s122, 1
        %s294 = scalar_lea.sflag [#allocation4], %s293
        %s295 = sand.u32 %s122, 1
        %s296 = smul.addr %s295, 64
        %s297 = scalar_lea.vmem [#allocation6], %s296
        // Predicated region
        $region37: #{tpu_custom_call.1} parent=31 // pred_check
          %p298 = pneg %p132
        $region38: #{tpu_custom_call.1} parent=31 // pred_check_branch
          %300 = sbr.rel (%p298) target = $region40
        $region39: #{tpu_custom_call.1} parent=31 // pred_region
          %s301 = smul.u32 4, %s23
          %s302 = smul.u32 2, %s24
          %s304 = ssub.s32 1024, 1024
          %305 = vsyncadd %s294, %s304
          %s306 = sadd.s32 %s25, %s302
          %s307 = smul.addr %s301, 2
          %s308 = sadd.s32 %s306, %s307
          %s309 = smul.addr %s308, 128
          %s310 = scalar_lea.hbm %s3, %s309
          %s311 = sshll.u32 %s297, 4
          %s312 = int_to_ptr.vmem [resolvable:$true] %s311
          %317 = dma.vmem_to_hbm [thread:$0]  %s312, 1024, %s310, %s294, 128, 128, 8
        $region40: #{tpu_custom_call.1} parent=31 // pred_fallthru
          _
      $region32: #{tpu_custom_call.1} parent=5 // pred_fallthru
        _
      %p318 = scmp.le.s32.totalorder 2, %s13
      // Predicated region
      $region41: #{tpu_custom_call.1} parent=5 // pred_check
        %p319 = pneg %p318
      $region42: #{tpu_custom_call.1} parent=5 // pred_check_branch
        %321 = sbr.rel (%p319) target = $region44
      $region43: #{tpu_custom_call.1} parent=5 // pred_region
        %s322 = ssub.s32 %s13, 2
        // Predicated region
        $region45: #{tpu_custom_call.1} parent=43 // pred_check
          %p323 = pneg %p138
        $region46: #{tpu_custom_call.1} parent=43 // pred_check_branch
          %325 = sbr.rel (%p323) target = $region48
        $region47: #{tpu_custom_call.1} parent=43 // pred_region
          %s326 = sand.u32 %s123, 1
          %s327 = scalar_lea.sflag [#allocation4], %s326
          %s328 = sand.u32 %s123, 1
          %s329 = smul.addr %s328, 64
          %s330 = scalar_lea.vmem [#allocation6], %s329
          %331 = dma.done %s327, 1024
        $region48: #{tpu_custom_call.1} parent=43 // pred_fallthru
          _
      $region44: #{tpu_custom_call.1} parent=5 // pred_fallthru
        _
    $region6: #{tpu_custom_call.1} parent=1 // loop_footer
      %s17 = sadd.s32 1, %s13
    $region7: #{tpu_custom_call.1} parent=1 // loop_footer_branch
      %12 = sbr.rel target = $region3
    $region8: #{tpu_custom_call.1} parent=1 // loop_exit
      _
    %332 = vsyncpa [#allocation4], 1
    %s333 = scalar_lea.sflag [#allocation4], 1
    %334 = vsyncpa %s333, 1
    %335 = vsyncpa [#allocation5], 1
    %s336 = scalar_lea.sflag [#allocation5], 1
    %337 = vsyncpa %s336, 1

</llo_original>
